<compile_context>
chip_gen: v5e
topology: v5e:2x2
jax: 0.10.0
libtpu: 0.0.40
codegen_flags: <defaults>
</compile_context>

<pallas_src>
import jax
import jax.numpy as jnp
from jax import lax
from jax.experimental import pallas as pl
from jax.experimental.pallas import tpu as pltpu


def _l2_normalize(x, axis, eps=1e-12):
    """Matches the module's l2_normalize: x * rsqrt(max(sum(x^2), eps))."""
    sq = jnp.sum(x * x, axis=axis, keepdims=True)
    return x * lax.rsqrt(jnp.maximum(sq, jnp.asarray(eps, x.dtype)))


def _vmem_capacity_bytes():
    """Per-core VMEM capacity; conservative 64 MiB fallback (v7x) if the query fails."""
    try:
        info = pltpu.get_tpu_info()
        cap = getattr(info, "vmem_capacity_bytes", None)
        if cap:
            return int(cap)
    except Exception:
        pass
    return 64 << 20


def _pick_tb(B):
    """B tile: full dim when tiny; otherwise a multiple of 8, and >= 2 tiles once
    B >= 16 so the 'parallel' grid axis can shard across v7x's two TensorCores."""
    if B <= 8:
        return B                                    # == full dim, always legal
    cap = 128
    if B >= 16:
        half = ((-(-B // 2)) + 7) // 8 * 8          # round_up(ceil(B/2), 8)
        cap = min(cap, half)
    tb = min(cap, (B // 8) * 8)
    return max(8, tb)


def _pick_tl(L, max_tl, align):
    """L tile: full dim if it fits; otherwise prefer an exact divisor of L (multiple of
    the dtype's sublane packing) so the ragged tail path disappears entirely."""
    if L <= max_tl:
        return L                                    # full dim, no ragged tile
    d = (max_tl // align) * align
    while d >= align:
        if L % d == 0:
            return d
        d -= align
    return max(align, (max_tl // align) * align)    # ragged: tail handled in-kernel


def _make_pool_kernel(seq_len, block_l):
    """Streaming seq-max (input dtype) + f32 L2 normalize + bf16 MXU similarity."""
    ragged_l = (seq_len % block_l) != 0
    tail_rows = seq_len % block_l                   # static, only used when ragged

    def kernel(x_ref, knt_ref, xnorm_ref, sim_ref, max_acc):
        l = pl.program_id(1)
        last = pl.num_programs(1) - 1

        @pl.when(l == 0)
        def _init():
            max_acc[...] = jnp.full(max_acc.shape, -jnp.inf, dtype=max_acc.dtype)

        if ragged_l:
            # Only the tail tile pays anything extra: statically slice the valid rows
            # (trace-time constant) instead of an iota/where mask on every step.
            @pl.when(l != last)
            def _body():
                max_acc[...] = jnp.maximum(max_acc[...], jnp.max(x_ref[...], axis=1))

            @pl.when(l == last)
            def _tail():
                xt = x_ref[:, :tail_rows, :]        # (TB, tail_rows, D), valid data only
                max_acc[...] = jnp.maximum(max_acc[...], jnp.max(xt, axis=1))
        else:
            # Max stays in the input dtype (exact for bf16/f32): packed bf16 vmax on
            # v6e/v7x, no f32 materialization of the streamed tile.
            max_acc[...] = jnp.maximum(max_acc[...], jnp.max(x_ref[...], axis=1))

        @pl.when(l == last)
        def _finalize():
            x_mean = max_acc[...].astype(jnp.float32)                     # (TB, D)
            sq = jnp.sum(x_mean * x_mean, axis=-1, keepdims=True)
            x_norm = x_mean * lax.rsqrt(jnp.maximum(sq, jnp.float32(1e-12)))
            xnorm_ref[...] = x_norm
            # knt is resident bf16 (D, P_pad): single-pass MXU, f32 accumulate.
            sim_ref[...] = jnp.dot(x_norm.astype(jnp.bfloat16), knt_ref[...],
                                   preferred_element_type=jnp.float32)

    return kernel


def adapter_pool_forward(x_embed, prompt_key, top_k=1, block_b=None, block_l=None):
    """JAX/Pallas equivalent of AdapterPool.forward (cls_features=None, prompt_mask=None)."""
    # TODO(synk): batchwise_prompt=True branch (data-dependent torch.unique) not implemented;
    # config under test uses batchwise_prompt=False.
    B, L, D = x_embed.shape
    P, Dk = prompt_key.shape
    assert Dk == D

    # --- parameter-side prep (tiny, plain XLA, once per call) -------------------------
    k_norm = _l2_normalize(prompt_key.astype(jnp.float32), axis=1)            # (P, D) f32
    p_pad = ((P + 127) // 128) * 128                                          # lane-dense sim
    knt = jnp.zeros((D, p_pad), jnp.bfloat16).at[:, :P].set(
        k_norm.T.astype(jnp.bfloat16))                                        # (D, P_pad) bf16

    # --- generation-aware tiling / VMEM budget -----------------------------------------
    itemsize = x_embed.dtype.itemsize
    align = {4: 8, 2: 16, 1: 32}.get(itemsize, 8)           # sublane packing per dtype
    vmem_cap = _vmem_capacity_bytes()
    x_budget = (8 << 20) if vmem_cap <= (80 << 20) else (16 << 20)

    tb = block_b or _pick_tb(B)
    max_tl = max(align, x_budget // max(1, tb * D * itemsize))
    tl = block_l or _pick_tl(L, max_tl, align)
    grid = (pl.cdiv(B, tb), pl.cdiv(L, tl))

    x_tile_bytes = tb * tl * D * itemsize
    knt_bytes = D * p_pad * 2                                # bf16 resident key
    out_bytes = (tb * D + tb * p_pad) * 4
    acc_bytes = tb * D * itemsize
    need = 2 * x_tile_bytes + 2 * knt_bytes + 2 * out_bytes + acc_bytes + (2 << 20)
    vmem_limit = int(max(16 << 20, min(need, vmem_cap - (16 << 20))))

    kernel = _make_pool_kernel(L, tl)

    x_norm, sim_padded = pl.pallas_call(
        kernel,
        out_shape=(
            jax.ShapeDtypeStruct((B, D), jnp.float32),
            jax.ShapeDtypeStruct((B, p_pad), jnp.float32),
        ),
        grid=grid,
        in_specs=[
            pl.BlockSpec((tb, tl, D), lambda i, l: (i, l, 0)),
            pl.BlockSpec((D, p_pad), lambda i, l: (0, 0)),   # constant -> VMEM-resident
        ],
        out_specs=(
            pl.BlockSpec((tb, D), lambda i, l: (i, 0)),
            pl.BlockSpec((tb, p_pad), lambda i, l: (i, 0)),
        ),
        scratch_shapes=[pltpu.VMEM((tb, D), x_embed.dtype)],  # max accumulator, input dtype
        compiler_params=pltpu.CompilerParams(
            dimension_semantics=("parallel", "arbitrary"),
            vmem_limit_bytes=vmem_limit,
        ),
    )(x_embed, knt)

    sim = sim_padded[:, :P]

    # --- tiny epilogue in plain XLA ------------------------------------------------------
    _, idx = lax.top_k(sim, top_k)                     # (B, K) int32
    selected_key = jnp.take(k_norm, idx, axis=0)       # (B, K, D) == prompt_norm[idx]
    reduce_sim = jnp.sum(selected_key * x_norm[:, None, :]) / B

    return {
        "prompt_idx": idx,
        "prompt_norm": k_norm,
        "x_embed_norm": x_norm,
        "similarity": sim,
        "selected_key": selected_key,
        "reduce_sim": reduce_sim,
    }


def _reference(x_embed, prompt_key, top_k):
    """Plain-JAX f32 reference of the same forward."""
    x32 = x_embed.astype(jnp.float32)
    x_mean = jnp.max(x32, axis=1)
    xn = _l2_normalize(x_mean, axis=1)
    kn = _l2_normalize(prompt_key.astype(jnp.float32), axis=1)
    sim = xn @ kn.T
    _, idx = lax.top_k(sim, top_k)
    sel = jnp.take(kn, idx, axis=0)
    rs = jnp.sum(sel * xn[:, None, :]) / x_embed.shape[0]
    return xn, sim, rs


def _check(name, out, x_embed, prompt_key, top_k, atol=1e-2, rtol=1e-2):
    xn_ref, sim_ref, rs_ref = _reference(x_embed, prompt_key, top_k)
    assert out["prompt_idx"].shape == (x_embed.shape[0], top_k), name
    assert jnp.allclose(out["x_embed_norm"], xn_ref, atol=atol, rtol=rtol), name
    assert jnp.allclose(out["similarity"], sim_ref, atol=atol, rtol=rtol), name
    assert jnp.allclose(out["reduce_sim"], rs_ref, atol=atol, rtol=rtol), name


if __name__ == "__main__":
    key = jax.random.PRNGKey(0)
    k_x, k_pk, k_x2, k_x3, k_x4 = jax.random.split(key, 5)

    # --- Test 1: module-consistent small shapes (B=2, L=8, D=32, P=5, top_k=1), f32 ----
    B, L, D, P, TOP_K = 2, 8, 32, 5, 1
    x_embed = jax.random.normal(k_x, (B, L, D), dtype=jnp.float32)
    # Parameter: prompt_key ~ uniform(-1, 1)   (prompt_key_init='uniform' in __init__)
    prompt_key = jax.random.uniform(k_pk, (P, D), dtype=jnp.float32, minval=-1.0, maxval=1.0)

    out = adapter_pool_forward(x_embed, prompt_key, top_k=TOP_K)
    out = jax.tree_util.tree_map(jax.block_until_ready, out)
    assert out["prompt_norm"].shape == (P, D)
    assert out["x_embed_norm"].shape == (B, D)
    assert out["similarity"].shape == (B, P)
    assert out["selected_key"].shape == (B, TOP_K, D)
    assert out["reduce_sim"].shape == ()
    _check("t1", out, x_embed, prompt_key, TOP_K)

    # --- Test 2: multi L-tile streaming max (non-ragged), forced block_l ----------------
    x2 = jax.random.normal(k_x2, (4, 32, 64), dtype=jnp.float32)
    pk2 = jax.random.uniform(k_pk, (7, 64), dtype=jnp.float32, minval=-1.0, maxval=1.0)
    out2 = adapter_pool_forward(x2, pk2, top_k=2, block_l=8)
    out2 = jax.tree_util.tree_map(jax.block_until_ready, out2)
    _check("t2", out2, x2, pk2, 2)

    # --- Test 3: ragged L tail (L=20, block_l=8 -> tail of 4 valid rows) ----------------
    x3 = jax.random.normal(k_x3, (2, 20, 32), dtype=jnp.float32)
    pk3 = jax.random.uniform(k_pk, (5, 32), dtype=jnp.float32, minval=-1.0, maxval=1.0)
    out3 = adapter_pool_forward(x3, pk3, top_k=1, block_l=8)
    out3 = jax.tree_util.tree_map(jax.block_until_ready, out3)
    _check("t3", out3, x3, pk3, 1)

    # --- Test 4: bf16 streaming (half the HBM bytes; max is exact in bf16) --------------
    x4 = jax.random.normal(k_x4, (4, 16, 128), dtype=jnp.float32).astype(jnp.bfloat16)
    pk4 = jax.random.uniform(k_pk, (5, 128), dtype=jnp.float32, minval=-1.0, maxval=1.0)
    out4 = adapter_pool_forward(x4, pk4, top_k=1)
    out4 = jax.tree_util.tree_map(jax.block_until_ready, out4)
    _check("t4", out4, x4, pk4, 1, atol=2e-2, rtol=2e-2)

    print("KERNEL_OK")
</pallas_src>

<mosaic_0001>
module attributes {stable_mosaic.version = 11 : i64} {
  func.func @kernel(%arg0: i32, %arg1: i32, %arg2: memref<2x8x32xf32, #tpu.memory_space<vmem>>, %arg3: memref<32x128xbf16, #tpu.memory_space<vmem>>, %arg4: memref<2x32xf32, #tpu.memory_space<vmem>>, %arg5: memref<2x128xf32, #tpu.memory_space<vmem>>, %arg6: memref<2x32xf32, #tpu.memory_space<vmem>>) attributes {dimension_semantics = [#tpu.dimension_semantics<parallel>, #tpu.dimension_semantics<arbitrary>], iteration_bounds = array<i64: 1, 1>, scalar_prefetch = 0 : i64, scratch_operands = 1 : i64, tpu.core_type = #tpu.core_type<tc>, window_params = [{transform_indices = @transform_0, window_bounds = array<i64: 2, 8, 32>}, {pipeline_mode = #tpu.pipeline_mode<synchronous>, transform_indices = @transform_1, window_bounds = array<i64: 32, 128>}, {transform_indices = @transform_2, window_bounds = array<i64: 2, 32>}, {transform_indices = @transform_3, window_bounds = array<i64: 2, 128>}]} {
    %c0_i32 = arith.constant 0 : i32
    %0 = arith.cmpi eq, %arg1, %c0_i32 : i32
    %1 = arith.extui %0 : i1 to i32
    %c0_i32_0 = arith.constant 0 : i32
    %2 = arith.cmpi ne, %1, %c0_i32_0 : i32
    scf.if %2 {
      %cst_9 = arith.constant 0xFF800000 : f32
      %11 = vector.broadcast %cst_9 : f32 to vector<2x32xf32>
      %c0_10 = arith.constant 0 : index
      %c0_11 = arith.constant 0 : index
      %12 = vector.load %arg6[%c0_10, %c0_11] : memref<2x32xf32, #tpu.memory_space<vmem>>, vector<2x32xf32>
      tpu.vector_store %arg6[%c0_10, %c0_11], %11 {strides = array<i32>} : memref<2x32xf32, #tpu.memory_space<vmem>>, vector<2x32xf32>,
    } else {
    }
    %c0 = arith.constant 0 : index
    %c0_1 = arith.constant 0 : index
    %3 = vector.load %arg6[%c0, %c0_1] : memref<2x32xf32, #tpu.memory_space<vmem>>, vector<2x32xf32>
    %c0_2 = arith.constant 0 : index
    %c0_3 = arith.constant 0 : index
    %c0_4 = arith.constant 0 : index
    %4 = vector.load %arg2[%c0_2, %c0_3, %c0_4] : memref<2x8x32xf32, #tpu.memory_space<vmem>>, vector<2x8x32xf32>
    %cst = arith.constant dense<0xFF800000> : vector<2x32xf32>
    %5 = vector.multi_reduction <maximumf>, %4, %cst [1] : vector<2x8x32xf32> to vector<2x32xf32>
    %6 = arith.maximumf %3, %5 : vector<2x32xf32>
    %c0_5 = arith.constant 0 : index
    %c0_6 = arith.constant 0 : index
    %7 = vector.load %arg6[%c0_5, %c0_6] : memref<2x32xf32, #tpu.memory_space<vmem>>, vector<2x32xf32>
    tpu.vector_store %arg6[%c0_5, %c0_6], %6 {strides = array<i32>} : memref<2x32xf32, #tpu.memory_space<vmem>>, vector<2x32xf32>,
    %c0_i32_7 = arith.constant 0 : i32
    %8 = arith.cmpi eq, %arg1, %c0_i32_7 : i32
    %9 = arith.extui %8 : i1 to i32
    %c0_i32_8 = arith.constant 0 : i32
    %10 = arith.cmpi ne, %9, %c0_i32_8 : i32
    scf.if %10 {
      %c0_9 = arith.constant 0 : index
      %c0_10 = arith.constant 0 : index
      %11 = vector.load %arg6[%c0_9, %c0_10] : memref<2x32xf32, #tpu.memory_space<vmem>>, vector<2x32xf32>
      %12 = arith.mulf %11, %11 : vector<2x32xf32>
      %cst_11 = arith.constant dense<0.000000e+00> : vector<2xf32>
      %13 = vector.multi_reduction <add>, %12, %cst_11 [1] : vector<2x32xf32> to vector<2xf32>
      %14 = vector.shape_cast %13 : vector<2xf32> to vector<2x1xf32>
      %cst_12 = arith.constant 9.99999996E-13 : f32
      %15 = vector.broadcast %cst_12 : f32 to vector<2x1xf32>
      %16 = arith.maximumf %14, %15 : vector<2x1xf32>
      %17 = math.rsqrt %16 : vector<2x1xf32>
      %18 = vector.broadcast %17 : vector<2x1xf32> to vector<2x32xf32>
      %19 = arith.mulf %11, %18 : vector<2x32xf32>
      %c0_13 = arith.constant 0 : index
      %c0_14 = arith.constant 0 : index
      %20 = vector.load %arg4[%c0_13, %c0_14] : memref<2x32xf32, #tpu.memory_space<vmem>>, vector<2x32xf32>
      tpu.vector_store %arg4[%c0_13, %c0_14], %19 {strides = array<i32>} : memref<2x32xf32, #tpu.memory_space<vmem>>, vector<2x32xf32>,
      %21 = arith.truncf %19 : vector<2x32xf32> to vector<2x32xbf16>
      %c0_15 = arith.constant 0 : index
      %c0_16 = arith.constant 0 : index
      %22 = vector.load %arg3[%c0_15, %c0_16] : memref<32x128xbf16, #tpu.memory_space<vmem>>, vector<32x128xbf16>
      %cst_17 = arith.constant dense<0.000000e+00> : vector<2x128xf32>
      %23 = tpu.matmul %21, %22, %cst_17 {dimension_numbers = #tpu.dot_dimension_numbers<[1], [0], [0], [1], [0, 0, 1, 1], [], []>} : vector<2x32xbf16>, vector<32x128xbf16>, vector<2x128xf32> -> vector<2x128xf32>
      %c0_18 = arith.constant 0 : index
      %c0_19 = arith.constant 0 : index
      %24 = vector.load %arg5[%c0_18, %c0_19] : memref<2x128xf32, #tpu.memory_space<vmem>>, vector<2x128xf32>
      tpu.vector_store %arg5[%c0_18, %c0_19], %23 {strides = array<i32>} : memref<2x128xf32, #tpu.memory_space<vmem>>, vector<2x128xf32>,
    } else {
    }
    return
  }
  func.func @transform_0(%arg0: i32, %arg1: i32) -> (i32, i32, i32) {
    %c0_i32 = arith.constant 0 : i32
    %c0_i32_0 = arith.constant 0 : i32
    return %arg0, %arg1, %c0_i32 : i32, i32, i32
  }
  func.func @transform_1(%arg0: i32, %arg1: i32) -> (i32, i32) {
    %c0_i32 = arith.constant 0 : i32
    %c0_i32_0 = arith.constant 0 : i32
    %c0_i32_1 = arith.constant 0 : i32
    return %c0_i32, %c0_i32_0 : i32, i32
  }
  func.func @transform_2(%arg0: i32, %arg1: i32) -> (i32, i32) {
    %c0_i32 = arith.constant 0 : i32
    %c0_i32_0 = arith.constant 0 : i32
    return %arg0, %c0_i32 : i32, i32
  }
  func.func @transform_3(%arg0: i32, %arg1: i32) -> (i32, i32) {
    %c0_i32 = arith.constant 0 : i32
    %c0_i32_0 = arith.constant 0 : i32
    return %arg0, %c0_i32 : i32, i32
  }
}

</mosaic_0001>

<llo_original>
// kernel: tpu_custom_call.1
$region0: #{tpu_custom_call.1}
  #allocation0 [shape = 'u32[]', space=smem, size = 0x4, offset = 0x4, fixed_abs, tag = 'smem constant byte address 0x4 - core index']
  #allocation1 [shape = 'u32[72,128]{1,0:T(1,128)}', space=vmem, size = 0x9000, scoped, tag = 'internal scratch']
  #allocation2 [shape = 'f32[2,32]{1,0:T(2,128)}', space=vmem, size = 0x400, scoped, tag = 'scratch operand']
  %s0 = inlined_call_operand.hbm [shape: f32[2,8,32], index: 0, kind: input, shape index: {}]
  %s1 = inlined_call_operand.hbm [shape: bf16[32,128], index: 1, kind: input, shape index: {}]
  %s2 = inlined_call_operand.hbm [shape: f32[2,32], index: 2, kind: output, shape index: {0}]
  %s3 = inlined_call_operand.hbm [shape: f32[2,128], index: 3, kind: output, shape index: {1}]
  %4 = xla_tuple %s2, %s3
  %s5 = sld [smem:[#allocation0]]
  $region42: #{tpu_custom_call.1} parent=0
    _
  %s7 = ssub.s32 1, %s5
  %s8 = scalar_select 0, %s7, %s5
  $region1: #{tpu_custom_call.1} parent=0
    #allocation3 [shape = 'u8[8192]{0}', space=vmem, size = 0x2000, scoped, tag = 'input window, operand 0, single buffered']
    #allocation4 [shape = 's32[1]{0}', space=sflag, size = 0x4, scoped, tag = 'scoped memory for tpu_custom_call.1']
    #allocation5 [shape = 's32[1]{0}', space=sflag, size = 0x4, scoped, tag = 'scoped memory for tpu_custom_call.1']
    #allocation6 [shape = 'u8[8192]{0}', space=vmem, size = 0x2000, scoped, tag = 'input window, operand 1, single buffered']
    #allocation7 [shape = 's32[1]{0}', space=sflag, size = 0x4, scoped, tag = 'scoped memory for tpu_custom_call.1']
    #allocation8 [shape = 'u8[1024]{0}', space=vmem, size = 0x400, scoped, tag = 'output window, operand 0, single buffered']
    #allocation9 [shape = 'u8[1024]{0}', space=vmem, size = 0x400, scoped, tag = 'output window, operand 1, single buffered']
    #allocation10 [shape = 's32[1]{0}', space=sflag, size = 0x4, scoped, tag = 'scoped memory for tpu_custom_call.1']
    %9 = vsyncpa [#allocation4], 0
    %10 = vsyncpa [#allocation7], 0
    %11 = vsyncpa [#allocation5], 0
    %12 = vsyncpa [#allocation10], 0
    // Predicated region
    $region2: #{tpu_custom_call.1} parent=1 // pred_check
      _
    $region3: #{tpu_custom_call.1} parent=1 // pred_check_branch
      %14 = sbr.rel (0) target = $region5
    $region4: #{tpu_custom_call.1} parent=1 // pred_region
      %16 = vsyncadd [#allocation4], 0
      %s17 = sshll.u32 %s0, 4
      %s18 = int_to_ptr.hbm [resolvable:$true] %s17
      %s19 = sshll.u32 [#allocation3], 4
      %s20 = int_to_ptr.vmem [resolvable:$true] %s19
      %25 = dma.hbm_to_vmem [thread:$0]  %s18, 256, %s20, [#allocation4], 128, 128, 8
    $region5: #{tpu_custom_call.1} parent=1 // pred_fallthru
      _
    // Predicated region
    $region6: #{tpu_custom_call.1} parent=1 // pred_check
      _
    $region7: #{tpu_custom_call.1} parent=1 // pred_check_branch
      %27 = sbr.rel (0) target = $region9
    $region8: #{tpu_custom_call.1} parent=1 // pred_region
      %29 = vsyncadd [#allocation7], 0
      %s30 = sshll.u32 %s1, 4
      %s31 = int_to_ptr.hbm [resolvable:$true] %s30
      %s32 = sshll.u32 [#allocation6], 4
      %s33 = int_to_ptr.vmem [resolvable:$true] %s32
      %38 = dma.hbm_to_vmem [thread:$0]  %s31, 256, %s33, [#allocation7], 64, 64, 4
    $region9: #{tpu_custom_call.1} parent=1 // pred_fallthru
      _
    // Predicated region
    $region10: #{tpu_custom_call.1} parent=1 // pred_check
      _
    $region11: #{tpu_custom_call.1} parent=1 // pred_check_branch
      %40 = sbr.rel (0) target = $region13
    $region12: #{tpu_custom_call.1} parent=1 // pred_region
      %42 = dma.done [#allocation4], 256
    $region13: #{tpu_custom_call.1} parent=1 // pred_fallthru
      _
    // Predicated region
    $region14: #{tpu_custom_call.1} parent=1 // pred_check
      _
    $region15: #{tpu_custom_call.1} parent=1 // pred_check_branch
      %44 = sbr.rel (0) target = $region17
    $region16: #{tpu_custom_call.1} parent=1 // pred_region
      %46 = dma.done [#allocation7], 256
    $region17: #{tpu_custom_call.1} parent=1 // pred_fallthru
      _
    %p48 = scmp.eq.s32.totalorder 0, 0
    // Predicated region
    $region18: #{tpu_custom_call.1} parent=1 // pred_check
      %p49 = pneg %p48
    $region19: #{tpu_custom_call.1} parent=1 // pred_check_branch
      %51 = sbr.rel (%p49) target = $region21
    $region20: #{tpu_custom_call.1} parent=1 // pred_region
      %vm52 = vcmask 254976
      %53 = vst.msk [vmem:[#allocation2] sm:$0x3] %vm52, -inf
    $region21: #{tpu_custom_call.1} parent=1 // pred_fallthru
      _
    %v54 = vld [vmem:[#allocation2] sm:$0x3]
    %v55 = vld [vmem:[#allocation3] sm:$0xff]
    %v56 = vld [vmem:[#allocation3 + $0x8] sm:$0xff]
    %vm57 = vcmask 261120
    %v58 = vsel %vm57, %v55, -inf
    %v59 = vrot.slane %v58, 4
    %v60 = vmax.f32 %v58, %v59
    %v61 = vrot.slane %v60, 2
    %v62 = vmax.f32 %v60, %v61
    %v63 = vrot.slane %v62, 1
    %v64 = vmax.f32 %v62, %v63
    %v65 = vsel %vm57, %v56, -inf
    %v66 = vrot.slane %v65, 4
    %v67 = vmax.f32 %v65, %v66
    %v68 = vrot.slane %v67, 2
    %v69 = vmax.f32 %v67, %v68
    %v70 = vrot.slane %v69, 1
    %v71 = vmax.f32 %v69, %v70
    %vm74 = vcmask 1041409
    %v75 = vsel %vm74, %v71, %v64
    %v77 = vmax.f32 %v54, %v75
    %vm78 = vcmask 254976
    %79 = vst.msk [vmem:[#allocation2] sm:$0x3] %vm78, %v77
    // Predicated region
    $region22: #{tpu_custom_call.1} parent=1 // pred_check
      %p80 = pneg %p48
    $region23: #{tpu_custom_call.1} parent=1 // pred_check_branch
      %82 = sbr.rel (%p80) target = $region25
    $region24: #{tpu_custom_call.1} parent=1 // pred_region
      %v83 = vld [vmem:[#allocation2] sm:$0x3]
      %v84 = vmul.f32 %v83, %v83
      %v85 = vsel %vm78, %v84, 0.0
      %86 = vadd.xlane.f32.xlu0 %v85
      %v87 = vpop.xlane.xlu0 %86
      %v88 = vmax.f32 %v87, 1e-12
      %v89 = vrsqrt.pop %v88
      %v90 = vmul.f32 %v89, %v88
      %v91 = vmul.f32 %v90, %v89
      %v92 = vmul.f32 0.5, %v91
      %v93 = vsub.f32 1.5, %v92
      %v94 = vmul.f32 %v89, %v93
      %vm95 = vweird.f32 %v88
      %vm96 = vweird.f32 %v89
      %vm97 = vmor %vm95, %vm96
      %v98 = vsel %vm97, %v89, %v94
      %v99 = vmul.f32 %v83, %v98
      %100 = vst.msk [vmem:[#allocation8] sm:$0x3] %vm78, %v99
      %v101 = vpack.c.bf16 %v99, %v99
      %v102 = vld [vmem:[#allocation6] sm:$0xf]
      %v103 = vld [vmem:[#allocation6 + $0x4] sm:$0xf]
      %v104 = vld [vmem:[#allocation6 + $0x8] sm:$0xf]
      %v105 = vld [vmem:[#allocation6 + $0xc] sm:$0xf]
      %v110 = vunpack.c.l.b16 %v102
      %v111 = vunpack.c.l.b16 %v103
      %v112 = vunpack.c.l.b16 %v104
      %v113 = vunpack.c.l.b16 %v105
      %v114 = vpack.c.b16 %v111, %v110
      %v115 = vpack.c.b16 %v113, %v112
      %v119 = vsel %vm57, %v101, 0
      %121 = vmatpush.bf16.msra.mxu0 0
      %122 = vmatpush.bf16.msra.mxu0 0
      %123 = vmatpush.bf16.msra.mxu0 0
      %124 = vmatpush.bf16.msra.mxu0 0
      %125 = vmatpush.bf16.msra.mxu0 0
      %126 = vmatpush.bf16.msra.mxu0 0
      %127 = vmatpush.bf16.msra.mxu0 %v115
      %128 = vmatpush.bf16.msra.mxu0 %v114
      %129 = vmatmul.bf16.gmra.mxu0 %v119
      %v130 = vpop.f32.mrf.mxu0
      %v131 = vadd.f32 0.0, %v130
      %v132 = vpop.f32.mrf.mxu0
      %133 = vdwg.mxu0
      %134 = vst [vmem:[#allocation9] sm:$0x3] %v131
    $region25: #{tpu_custom_call.1} parent=1 // pred_fallthru
      _
    // Predicated region
    $region26: #{tpu_custom_call.1} parent=1 // pred_check
      _
    $region27: #{tpu_custom_call.1} parent=1 // pred_check_branch
      %136 = sbr.rel (0) target = $region29
    $region28: #{tpu_custom_call.1} parent=1 // pred_region
      %138 = vsyncadd [#allocation5], 0
      %s140 = sshll.u32 [#allocation8], 4
      %s141 = int_to_ptr.vmem [resolvable:$true] %s140
      %s142 = sshll.u32 %s2, 4
      %s143 = int_to_ptr.hbm [resolvable:$true] %s142
      %145 = dma.vmem_to_hbm [thread:$0]  %s141, 32, %s143, [#allocation5]
    $region29: #{tpu_custom_call.1} parent=1 // pred_fallthru
      _
    // Predicated region
    $region30: #{tpu_custom_call.1} parent=1 // pred_check
      _
    $region31: #{tpu_custom_call.1} parent=1 // pred_check_branch
      %147 = sbr.rel (0) target = $region33
    $region32: #{tpu_custom_call.1} parent=1 // pred_region
      %149 = vsyncadd [#allocation10], 0
      %s151 = sshll.u32 [#allocation9], 4
      %s152 = int_to_ptr.vmem [resolvable:$true] %s151
      %s153 = sshll.u32 %s3, 4
      %s154 = int_to_ptr.hbm [resolvable:$true] %s153
      %156 = dma.vmem_to_hbm [thread:$0]  %s152, 32, %s154, [#allocation10]
    $region33: #{tpu_custom_call.1} parent=1 // pred_fallthru
      _
    // Predicated region
    $region34: #{tpu_custom_call.1} parent=1 // pred_check
      _
    $region35: #{tpu_custom_call.1} parent=1 // pred_check_branch
      %158 = sbr.rel (0) target = $region37
    $region36: #{tpu_custom_call.1} parent=1 // pred_region
      %160 = dma.done [#allocation5], 32
    $region37: #{tpu_custom_call.1} parent=1 // pred_fallthru
      _
    // Predicated region
    $region38: #{tpu_custom_call.1} parent=1 // pred_check
      _
    $region39: #{tpu_custom_call.1} parent=1 // pred_check_branch
      %162 = sbr.rel (0) target = $region41
    $region40: #{tpu_custom_call.1} parent=1 // pred_region
      %164 = dma.done [#allocation10], 32
    $region41: #{tpu_custom_call.1} parent=1 // pred_fallthru
      _
    %165 = vsyncpa [#allocation4], 1
    %166 = vsyncpa [#allocation7], 1
    %167 = vsyncpa [#allocation5], 1
    %168 = vsyncpa [#allocation10], 1

</llo_original>
